<compile_context>
chip_gen: v7x
topology: tpu7x:2x2x1
jax: 0.10.0
libtpu: 0.0.40
codegen_flags: <defaults>
</compile_context>

<pallas_src>
import jax
import jax.numpy as jnp
from jax.experimental import pallas as pl
from jax.experimental.pallas import tpu as pltpu

IN_FEATURES = 10
GROUP = 128            # batch rows folded onto the lane axis -> 1280 lanes (10 vregs)
TILE_GROUPS = 1024     # group-rows per grid step (=> 131072 batch rows, ~5 MiB/step)


def linear_kernel(b_ref, x_ref, w_ref, o_ref):
    # b_ref: SMEM (1,)                f32 bias scalar
    # x_ref: VMEM (TG, GROUP*IN)      f32 — GROUP batch rows folded onto lanes
    # w_ref: VMEM (GROUP*IN, GROUP)   f32 block-diagonal weights (resident)
    # o_ref: VMEM (TG, GROUP)         f32 — lane-dense per-row results
    acc = jnp.dot(x_ref[...], w_ref[...], preferred_element_type=jnp.float32)
    o_ref[...] = (acc + b_ref[0]).astype(o_ref.dtype)


def _tile_groups(ng, tile_groups=TILE_GROUPS):
    """Pick the group-row tile: multiple of 8 (or == ng), >=2 grid steps when possible."""
    if ng <= 8:
        return ng                       # single small block; Mosaic pads sub-8 M
    half = -(-ng // 2)                  # ceil(ng / 2): ensure >=2 steps (v7x megacore)
    tg = min(max(tile_groups, 8), ((half + 7) // 8) * 8)
    return tg                           # proven <= ng for ng > 8


def linear_forward(x, weight, bias, *, tile_groups=TILE_GROUPS):
    """x: (B, IN) f32; weight: (OUT, IN) (PyTorch layout); bias: (OUT,).

    Returns (B, OUT) = x @ weight.T + bias, OUT must be 1 (nn.Linear(10, 1)).
    """
    B, IN = x.shape
    OUT = weight.shape[0]
    assert OUT == 1 and weight.shape[1] == IN, "kernel specialized for nn.Linear(10, 1)"

    xf = x.astype(jnp.float32)

    # Zero-copy path: B a multiple of GROUP and large enough for 8-row MXU tiles.
    # Otherwise pay ONE fused pad pass up to a multiple of 8*GROUP (keeps M >= 8).
    if B % GROUP == 0 and B >= 8 * GROUP:
        B_pad = B
    else:
        step = 8 * GROUP
        B_pad = ((B + step - 1) // step) * step
        xf = jnp.pad(xf, ((0, B_pad - B), (0, 0)))
    NG = B_pad // GROUP

    # Free (row-major preserving) reshape: (B_pad, IN) -> (NG, GROUP*IN).
    xg = xf.reshape(NG, GROUP * IN)

    TG = _tile_groups(NG, tile_groups)
    grid = (pl.cdiv(NG, TG),)

    # Block-diagonal weights: wbd[g*IN + i, c] = w[i] if g == c else 0.
    # out[n, c] = sum_i x[n*GROUP + c, i] * w[i]  -> exactly nn.Linear's matvec.
    w = weight.reshape(IN).astype(jnp.float32)
    eye = jnp.eye(GROUP, dtype=jnp.float32)
    wbd = (eye[:, None, :] * w[None, :, None]).reshape(GROUP * IN, GROUP)
    b = bias.reshape(OUT).astype(jnp.float32)

    out = pl.pallas_call(
        linear_kernel,
        out_shape=jax.ShapeDtypeStruct((NG, GROUP), jnp.float32),
        grid=grid,
        in_specs=[
            pl.BlockSpec(memory_space=pltpu.MemorySpace.SMEM),        # bias scalar
            pl.BlockSpec((TG, GROUP * IN), lambda j: (j, 0)),         # x tile (lane-dense)
            pl.BlockSpec((GROUP * IN, GROUP), lambda j: (0, 0)),      # wbd, stays resident
        ],
        out_specs=pl.BlockSpec((TG, GROUP), lambda j: (j, 0)),        # lane-dense output
        compiler_params=pltpu.CompilerParams(
            dimension_semantics=("parallel",)),                       # megacore on v7x
    )(b, xg, wbd)

    # Free reshape back to (B_pad, 1); slice off padded rows only when we padded.
    out = out.reshape(B_pad, 1)
    if B_pad != B:
        out = out[:B]
    return out.astype(x.dtype)


if __name__ == "__main__":
    key = jax.random.PRNGKey(0)
    k_x1, k_x2, k_w, k_b = jax.random.split(key, 4)

    IN, OUT = IN_FEATURES, 1
    weight = jax.random.normal(k_w, (OUT, IN), dtype=jnp.float32) * 0.1
    bias = jax.random.normal(k_b, (OUT,), dtype=jnp.float32) * 0.1

    # Case 1: B multiple of 128*8 -> zero-copy reshape path, 2 grid steps.
    B1 = 2048
    x1 = jax.random.normal(k_x1, (B1, IN), dtype=jnp.float32)
    out1 = jax.block_until_ready(linear_forward(x1, weight, bias))
    ref1 = x1 @ weight.T + bias
    assert out1.shape == (B1, OUT)
    assert jnp.allclose(out1, ref1, atol=1e-4, rtol=1e-4)

    # Case 2: ragged batch -> single fused pad, same kernel, padded rows sliced off.
    B2 = 200
    x2 = jax.random.normal(k_x2, (B2, IN), dtype=jnp.float32)
    out2 = jax.block_until_ready(linear_forward(x2, weight, bias))
    ref2 = x2 @ weight.T + bias
    assert out2.shape == (B2, OUT)
    assert jnp.allclose(out2, ref2, atol=1e-4, rtol=1e-4)

    print("KERNEL_OK")
</pallas_src>

<mosaic_0001>
module attributes {stable_mosaic.version = 11 : i64} {
  func.func @linear_kernel(%arg0: i32, %arg1: memref<1xf32, #tpu.memory_space<smem>>, %arg2: memref<8x1280xf32, #tpu.memory_space<vmem>>, %arg3: memref<1280x128xf32, #tpu.memory_space<vmem>>, %arg4: memref<8x128xf32, #tpu.memory_space<vmem>>) attributes {dimension_semantics = [#tpu.dimension_semantics<parallel>], iteration_bounds = array<i64: 2>, scalar_prefetch = 0 : i64, scratch_operands = 0 : i64, tpu.core_type = #tpu.core_type<tc>, window_params = [{transform_indices = @transform_0, window_bounds = array<i64: 1>}, {transform_indices = @transform_1, window_bounds = array<i64: 8, 1280>}, {pipeline_mode = #tpu.pipeline_mode<synchronous>, transform_indices = @transform_2, window_bounds = array<i64: 1280, 128>}, {transform_indices = @transform_3, window_bounds = array<i64: 8, 128>}]} {
    %c0 = arith.constant 0 : index
    %c0_0 = arith.constant 0 : index
    %0 = vector.load %arg2[%c0, %c0_0] : memref<8x1280xf32, #tpu.memory_space<vmem>>, vector<8x1280xf32>
    %c0_1 = arith.constant 0 : index
    %c0_2 = arith.constant 0 : index
    %1 = vector.load %arg3[%c0_1, %c0_2] : memref<1280x128xf32, #tpu.memory_space<vmem>>, vector<1280x128xf32>
    %cst = arith.constant dense<0.000000e+00> : vector<8x128xf32>
    %2 = tpu.matmul %0, %1, %cst {dimension_numbers = #tpu.dot_dimension_numbers<[1], [0], [0], [1], [0, 0, 1, 1], [], []>} : vector<8x1280xf32>, vector<1280x128xf32>, vector<8x128xf32> -> vector<8x128xf32>
    %c0_3 = arith.constant 0 : index
    %3 = memref.load %arg1[%c0_3] : memref<1xf32, #tpu.memory_space<smem>>
    %4 = vector.broadcast %3 : f32 to vector<8x128xf32>
    %5 = arith.addf %2, %4 : vector<8x128xf32>
    %c0_4 = arith.constant 0 : index
    %c0_5 = arith.constant 0 : index
    %6 = vector.load %arg4[%c0_4, %c0_5] : memref<8x128xf32, #tpu.memory_space<vmem>>, vector<8x128xf32>
    tpu.vector_store %arg4[%c0_4, %c0_5], %5 {strides = array<i32>} : memref<8x128xf32, #tpu.memory_space<vmem>>, vector<8x128xf32>,
    return
  }
  func.func @transform_0(%arg0: i32) -> i32 {
    %c0_i32 = arith.constant 0 : i32
    %c0_i32_0 = arith.constant 0 : i32
    return %c0_i32 : i32
  }
  func.func @transform_1(%arg0: i32) -> (i32, i32) {
    %c0_i32 = arith.constant 0 : i32
    %c0_i32_0 = arith.constant 0 : i32
    return %arg0, %c0_i32 : i32, i32
  }
  func.func @transform_2(%arg0: i32) -> (i32, i32) {
    %c0_i32 = arith.constant 0 : i32
    %c0_i32_0 = arith.constant 0 : i32
    %c0_i32_1 = arith.constant 0 : i32
    return %c0_i32, %c0_i32_0 : i32, i32
  }
  func.func @transform_3(%arg0: i32) -> (i32, i32) {
    %c0_i32 = arith.constant 0 : i32
    %c0_i32_0 = arith.constant 0 : i32
    return %arg0, %c0_i32 : i32, i32
  }
}

</mosaic_0001>

<llo_original>
// kernel: tpu_custom_call.1
$region0: #{tpu_custom_call.1}
  #allocation0 [shape = 'u32[]', space=smem, size = 0x4, offset = 0x4, fixed_abs, tag = 'smem constant byte address 0x4 - core index']
  #allocation1 [shape = 'u32[144,128]{1,0:T(1,128)}', space=vmem, size = 0x12000, scoped, tag = 'internal scratch']
  #allocation2 [shape = 'f32[1]{0:T(128)S(6)}', space=smem, size = 0x200, scoped, tag = 'scoped memory for tpu_custom_call.1']
  %s0 = inlined_call_operand.<no memory space> [shape: f32[1], index: 0, kind: input, shape index: {}]
  %s1 = inlined_call_operand.hbm [shape: f32[16,1280], index: 1, kind: input, shape index: {}]
  %s2 = inlined_call_operand.hbm [shape: f32[1280,128], index: 2, kind: input, shape index: {}]
  %s3 = inlined_call_operand.hbm [shape: f32[16,128], index: 3, kind: output, shape index: {}]
  %s4 = sld [smem:[#allocation0]]
  $region53: #{tpu_custom_call.1} parent=0
    _
  %s6 = ssub.s32 1, %s4
  %s7 = scalar_select 0, %s6, %s4
  %8 = sst [smem:[#allocation2]] %s0
  $region1: #{tpu_custom_call.1} parent=0
    #allocation3 [shape = 'u8[81920]{0}', space=vmem, size = 0x14000, scoped, tag = 'input window, operand 1']
    #allocation4 [shape = 's32[2]{0}', space=sflag, size = 0x8, scoped, tag = 'scoped memory for tpu_custom_call.1']
    #allocation5 [shape = 's32[2]{0}', space=sflag, size = 0x8, scoped, tag = 'scoped memory for tpu_custom_call.1']
    #allocation6 [shape = 'u8[655360]{0}', space=vmem, size = 0xa0000, scoped, tag = 'input window, operand 2, single buffered']
    #allocation7 [shape = 's32[1]{0}', space=sflag, size = 0x4, scoped, tag = 'scoped memory for tpu_custom_call.1']
    #allocation8 [shape = 'u8[8192]{0}', space=vmem, size = 0x2000, scoped, tag = 'output window, operand 0']
    %9 = vsyncpa [#allocation4], 0
    %s10 = scalar_lea.sflag [#allocation4], 1
    %11 = vsyncpa %s10, 0
    %12 = vsyncpa [#allocation7], 0
    %13 = vsyncpa [#allocation5], 0
    %s14 = scalar_lea.sflag [#allocation5], 1
    %15 = vsyncpa %s14, 0
    loop: start=0, step=1, limit=4
    $region2: #{tpu_custom_call.1} parent=1 // loop_pre_header
      _
    $region3: #{tpu_custom_call.1} parent=1 // loop_header
      %s17 = sphi 0, %s21
      %p18 = scmp.ge.s32.totalorder %s17, 4
      %s25 = sphi 0, %s25
      %s27 = sphi 0, %s25
      %s28 = sphi 0, %s27
      %s42 = sphi 0, %s28
      %s48 = sphi 0, %s50
      %s51 = sphi 0, %s48
      %s52 = sphi 0, %s51
      %s68 = sphi 0, %s52
      %s72 = sphi 0, %s72
      %s74 = sphi 0, %s72
      %s75 = sphi 0, %s74
      %s89 = sphi 0, %s75
      %s95 = sphi 0, %s97
      %s98 = sphi 0, %s95
      %s99 = sphi 0, %s98
      %s115 = sphi 0, %s99
    $region4: #{tpu_custom_call.1} parent=1 // loop_header_branch
      %20 = sbr.rel (%p18) target = $region8
    $region5: #{tpu_custom_call.1} parent=1 // loop_body
      %s22 = ssub.s32 %s17, 1
      %s23 = ssub.s32 %s17, 2
      %s24 = sadd.s32 %s17, 1
      %s26 = sadd.s32 %s25, 1
      %p29 = scmp.eq.s32.totalorder %s17, 1
      %p30 = scmp.ne.s32.totalorder %s25, %s27
      %p31 = scmp.eq.s32.totalorder %s17, 0
      %p32 = por %p30, %p31
      %p33 = scmp.ne.s32.totalorder %s25, %s27
      %p34 = scmp.eq.s32.totalorder %s22, 1
      %p35 = por %p33, %p34
      %p36 = scmp.ne.s32.totalorder %s27, %s28
      %p37 = scmp.eq.s32.totalorder %s22, 0
      %p38 = por %p36, %p37
      %p39 = scmp.ne.s32.totalorder %s27, %s28
      %p40 = scmp.eq.s32.totalorder %s23, 1
      %p41 = por %p39, %p40
      %p43 = scmp.ne.s32.totalorder %s28, %s42
      %p44 = scmp.eq.s32.totalorder %s23, 0
      %p45 = por %p43, %p44
      %s46 = ssub.s32 %s17, %s24
      %p47 = scmp.eq.s32.totalorder %s46, 0
      %s49 = sadd.s32 %s48, 1
      %s50 = scalar_select %p47, %s48, %s49
      %p53 = pneg %p47
      %p54 = scmp.eq.s32.totalorder %s17, 1
      %p55 = por %p53, %p54
      %p56 = scmp.ne.s32.totalorder %s48, %s51
      %p57 = scmp.eq.s32.totalorder %s17, 0
      %p58 = por %p56, %p57
      %p59 = scmp.ne.s32.totalorder %s48, %s51
      %p60 = scmp.eq.s32.totalorder %s22, 1
      %p61 = por %p59, %p60
      %p62 = scmp.ne.s32.totalorder %s51, %s52
      %p63 = scmp.eq.s32.totalorder %s22, 0
      %p64 = por %p62, %p63
      %p65 = scmp.ne.s32.totalorder %s51, %s52
      %p66 = scmp.eq.s32.totalorder %s23, 1
      %p67 = por %p65, %p66
      %p69 = scmp.ne.s32.totalorder %s52, %s68
      %p70 = scmp.eq.s32.totalorder %s23, 0
      %p71 = por %p69, %p70
      %s73 = sadd.s32 %s72, 1
      %p76 = scmp.eq.s32.totalorder %s17, 1
      %p77 = scmp.ne.s32.totalorder %s72, %s74
      %p78 = scmp.eq.s32.totalorder %s17, 0
      %p79 = por %p77, %p78
      %p80 = scmp.ne.s32.totalorder %s72, %s74
      %p81 = scmp.eq.s32.totalorder %s22, 1
      %p82 = por %p80, %p81
      %p83 = scmp.ne.s32.totalorder %s74, %s75
      %p84 = scmp.eq.s32.totalorder %s22, 0
      %p85 = por %p83, %p84
      %p86 = scmp.ne.s32.totalorder %s74, %s75
      %p87 = scmp.eq.s32.totalorder %s23, 1
      %p88 = por %p86, %p87
      %p90 = scmp.ne.s32.totalorder %s75, %s89
      %p91 = scmp.eq.s32.totalorder %s23, 0
      %p92 = por %p90, %p91
      %s93 = ssub.s32 %s17, %s24
      %p94 = scmp.eq.s32.totalorder %s93, 0
      %s96 = sadd.s32 %s95, 1
      %s97 = scalar_select %p94, %s95, %s96
      %p100 = pneg %p94
      %p101 = scmp.eq.s32.totalorder %s17, 1
      %p102 = por %p100, %p101
      %p103 = scmp.ne.s32.totalorder %s95, %s98
      %p104 = scmp.eq.s32.totalorder %s17, 0
      %p105 = por %p103, %p104
      %p106 = scmp.ne.s32.totalorder %s95, %s98
      %p107 = scmp.eq.s32.totalorder %s22, 1
      %p108 = por %p106, %p107
      %p109 = scmp.ne.s32.totalorder %s98, %s99
      %p110 = scmp.eq.s32.totalorder %s22, 0
      %p111 = por %p109, %p110
      %p112 = scmp.ne.s32.totalorder %s98, %s99
      %p113 = scmp.eq.s32.totalorder %s23, 1
      %p114 = por %p112, %p113
      %p116 = scmp.ne.s32.totalorder %s99, %s115
      %p117 = scmp.eq.s32.totalorder %s23, 0
      %p118 = por %p116, %p117
      %p119 = scmp.le.s32.totalorder 1, %s17
      %p120 = scmp.lt.s32.totalorder %s17, 3
      %p121 = pnand %p119, %p120
      %p122 = pneg %p121
      // Predicated region
      $region9: #{tpu_custom_call.1} parent=5 // pred_check
        _
      $region10: #{tpu_custom_call.1} parent=5 // pred_check_branch
        %124 = sbr.rel (%p121) target = $region12
      $region11: #{tpu_custom_call.1} parent=5 // pred_region
        %s125 = ssub.s32 %s17, 1
        // Predicated region
        $region13: #{tpu_custom_call.1} parent=11 // pred_check
          %p126 = pneg %p38
        $region14: #{tpu_custom_call.1} parent=11 // pred_check_branch
          %128 = sbr.rel (%p126) target = $region16
        $region15: #{tpu_custom_call.1} parent=11 // pred_region
          _
        $region16: #{tpu_custom_call.1} parent=11 // pred_fallthru
          _
        // Predicated region
        $region17: #{tpu_custom_call.1} parent=11 // pred_check
          %p129 = pneg %p85
        $region18: #{tpu_custom_call.1} parent=11 // pred_check_branch
          %131 = sbr.rel (%p129) target = $region20
        $region19: #{tpu_custom_call.1} parent=11 // pred_region
          %s133 = ssub.s32 20480, 20480
          %134 = vsyncadd [#allocation7], %s133
          %s135 = sshll.u32 [#allocation6], 4
          %s136 = int_to_ptr.vmem [resolvable:$true] %s135
          %141 = dma.hbm_to_vmem [thread:$0]  %s2, 20480, %s136, [#allocation7], 128, 128, 8
        $region20: #{tpu_custom_call.1} parent=11 // pred_fallthru
          _
      $region12: #{tpu_custom_call.1} parent=5 // pred_fallthru
        _
      %p142 = scmp.lt.s32.totalorder %s17, 2
      // Predicated region
      $region21: #{tpu_custom_call.1} parent=5 // pred_check
        %p143 = pneg %p142
      $region22: #{tpu_custom_call.1} parent=5 // pred_check_branch
        %145 = sbr.rel (%p143) target = $region24
      $region23: #{tpu_custom_call.1} parent=5 // pred_region
        // Predicated region
        $region25: #{tpu_custom_call.1} parent=23 // pred_check
          %p146 = pneg %p58
        $region26: #{tpu_custom_call.1} parent=23 // pred_check_branch
          %148 = sbr.rel (%p146) target = $region28
        $region27: #{tpu_custom_call.1} parent=23 // pred_region
          %s149 = sand.u32 %s48, 1
          %s150 = scalar_lea.sflag [#allocation4], %s149
          %s151 = sand.u32 %s48, 1
          %s152 = smul.addr %s151, 80
          %s153 = scalar_lea.vmem [#allocation3], %s152
          %s155 = ssub.s32 1280, 1280
          %156 = vsyncadd %s150, %s155
          %s157 = smul.addr %s17, 10
          %s158 = smul.addr %s157, 128
          %s159 = scalar_lea.hbm %s1, %s158
          %s161 = sshll.u32 %s153, 4
          %s162 = int_to_ptr.vmem [resolvable:$true] %s161
          %164 = dma.hbm_to_vmem [thread:$0]  %s159, 1280, %s162, %s150
        $region28: #{tpu_custom_call.1} parent=23 // pred_fallthru
          _
      $region24: #{tpu_custom_call.1} parent=5 // pred_fallthru
        _
      %p165 = scmp.le.s32.totalorder 1, %s17
      %p166 = scmp.lt.s32.totalorder %s17, 3
      %p167 = pnand %p165, %p166
      %p168 = pneg %p167
      // Predicated region
      $region29: #{tpu_custom_call.1} parent=5 // pred_check
        _
      $region30: #{tpu_custom_call.1} parent=5 // pred_check_branch
        %170 = sbr.rel (%p167) target = $region32
      $region31: #{tpu_custom_call.1} parent=5 // pred_region
        %s171 = ssub.s32 %s17, 1
        %s172 = sand.u32 %s51, 1
        %s173 = scalar_lea.sflag [#allocation4], %s172
        %s174 = sand.u32 %s51, 1
        %s175 = smul.addr %s174, 80
        %s176 = scalar_lea.vmem [#allocation3], %s175
        // Predicated region
        $region33: #{tpu_custom_call.1} parent=31 // pred_check
          %p177 = pneg %p64
        $region34: #{tpu_custom_call.1} parent=31 // pred_check_branch
          %179 = sbr.rel (%p177) target = $region36
        $region35: #{tpu_custom_call.1} parent=31 // pred_region
          %180 = dma.done %s173, 1280
        $region36: #{tpu_custom_call.1} parent=31 // pred_fallthru
          _
        // Predicated region
        $region37: #{tpu_custom_call.1} parent=31 // pred_check
          %p181 = pneg %p85
        $region38: #{tpu_custom_call.1} parent=31 // pred_check_branch
          %183 = sbr.rel (%p181) target = $region40
        $region39: #{tpu_custom_call.1} parent=31 // pred_region
          %184 = dma.done [#allocation7], 20480
        $region40: #{tpu_custom_call.1} parent=31 // pred_fallthru
          _
        %p185 = pneg %p38
        %p186 = pneg %p35
        %s187 = sand.u32 %s51, 1
        %s188 = scalar_lea.sflag [#allocation4], %s187
        %s189 = sand.u32 %s51, 1
        %s190 = smul.addr %s189, 80
        %s191 = scalar_lea.vmem [#allocation3], %s190
        %p192 = pneg %p64
        %p193 = pneg %p61
        %p194 = pneg %p85
        %p195 = pneg %p82
        %p196 = pneg %p111
        %p197 = pneg %p108
        %s198 = sand.u32 %s98, 1
        %s199 = scalar_lea.sflag [#allocation5], %s198
        %s200 = sand.u32 %s98, 1
        %s201 = smul.addr %s200, 8
        %s202 = scalar_lea.vmem [#allocation8], %s201
        %v203 = vld [vmem:[%s176] sm:$0xff]
        %v204 = vld [vmem:[%s176 + $0x8] sm:$0xff]
        %v205 = vld [vmem:[%s176 + $0x10] sm:$0xff]
        %v206 = vld [vmem:[%s176 + $0x18] sm:$0xff]
        %v207 = vld [vmem:[%s176 + $0x20] sm:$0xff]
        %v208 = vld [vmem:[%s176 + $0x28] sm:$0xff]
        %v209 = vld [vmem:[%s176 + $0x30] sm:$0xff]
        %v210 = vld [vmem:[%s176 + $0x38] sm:$0xff]
        %v211 = vld [vmem:[%s176 + $0x40] sm:$0xff]
        %v212 = vld [vmem:[%s176 + $0x48] sm:$0xff]
        %v213 = vld [vmem:[#allocation6] sm:$0xff]
        %v214 = vld [vmem:[#allocation6 + $0x8] sm:$0xff]
        %v215 = vld [vmem:[#allocation6 + $0x10] sm:$0xff]
        %v216 = vld [vmem:[#allocation6 + $0x18] sm:$0xff]
        %v217 = vld [vmem:[#allocation6 + $0x20] sm:$0xff]
        %v218 = vld [vmem:[#allocation6 + $0x28] sm:$0xff]
        %v219 = vld [vmem:[#allocation6 + $0x30] sm:$0xff]
        %v220 = vld [vmem:[#allocation6 + $0x38] sm:$0xff]
        %v221 = vld [vmem:[#allocation6 + $0x40] sm:$0xff]
        %v222 = vld [vmem:[#allocation6 + $0x48] sm:$0xff]
        %v223 = vld [vmem:[#allocation6 + $0x50] sm:$0xff]
        %v224 = vld [vmem:[#allocation6 + $0x58] sm:$0xff]
        %v225 = vld [vmem:[#allocation6 + $0x60] sm:$0xff]
        %v226 = vld [vmem:[#allocation6 + $0x68] sm:$0xff]
        %v227 = vld [vmem:[#allocation6 + $0x70] sm:$0xff]
        %v228 = vld [vmem:[#allocation6 + $0x78] sm:$0xff]
        %v229 = vld [vmem:[#allocation6 + $0x80] sm:$0xff]
        %v230 = vld [vmem:[#allocation6 + $0x88] sm:$0xff]
        %v231 = vld [vmem:[#allocation6 + $0x90] sm:$0xff]
        %v232 = vld [vmem:[#allocation6 + $0x98] sm:$0xff]
        %v233 = vld [vmem:[#allocation6 + $0xa0] sm:$0xff]
        %v234 = vld [vmem:[#allocation6 + $0xa8] sm:$0xff]
        %v235 = vld [vmem:[#allocation6 + $0xb0] sm:$0xff]
        %v236 = vld [vmem:[#allocation6 + $0xb8] sm:$0xff]
        %v237 = vld [vmem:[#allocation6 + $0xc0] sm:$0xff]
        %v238 = vld [vmem:[#allocation6 + $0xc8] sm:$0xff]
        %v239 = vld [vmem:[#allocation6 + $0xd0] sm:$0xff]
        %v240 = vld [vmem:[#allocation6 + $0xd8] sm:$0xff]
        %v241 = vld [vmem:[#allocation6 + $0xe0] sm:$0xff]
        %v242 = vld [vmem:[#allocation6 + $0xe8] sm:$0xff]
        %v243 = vld [vmem:[#allocation6 + $0xf0] sm:$0xff]
        %v244 = vld [vmem:[#allocation6 + $0xf8] sm:$0xff]
        %v245 = vld [vmem:[#allocation6 + $0x100] sm:$0xff]
        %v246 = vld [vmem:[#allocation6 + $0x108] sm:$0xff]
        %v247 = vld [vmem:[#allocation6 + $0x110] sm:$0xff]
        %v248 = vld [vmem:[#allocation6 + $0x118] sm:$0xff]
        %v249 = vld [vmem:[#allocation6 + $0x120] sm:$0xff]
        %v250 = vld [vmem:[#allocation6 + $0x128] sm:$0xff]
        %v251 = vld [vmem:[#allocation6 + $0x130] sm:$0xff]
        %v252 = vld [vmem:[#allocation6 + $0x138] sm:$0xff]
        %v253 = vld [vmem:[#allocation6 + $0x140] sm:$0xff]
        %v254 = vld [vmem:[#allocation6 + $0x148] sm:$0xff]
        %v255 = vld [vmem:[#allocation6 + $0x150] sm:$0xff]
        %v256 = vld [vmem:[#allocation6 + $0x158] sm:$0xff]
        %v257 = vld [vmem:[#allocation6 + $0x160] sm:$0xff]
        %v258 = vld [vmem:[#allocation6 + $0x168] sm:$0xff]
        %v259 = vld [vmem:[#allocation6 + $0x170] sm:$0xff]
        %v260 = vld [vmem:[#allocation6 + $0x178] sm:$0xff]
        %v261 = vld [vmem:[#allocation6 + $0x180] sm:$0xff]
        %v262 = vld [vmem:[#allocation6 + $0x188] sm:$0xff]
        %v263 = vld [vmem:[#allocation6 + $0x190] sm:$0xff]
        %v264 = vld [vmem:[#allocation6 + $0x198] sm:$0xff]
        %v265 = vld [vmem:[#allocation6 + $0x1a0] sm:$0xff]
        %v266 = vld [vmem:[#allocation6 + $0x1a8] sm:$0xff]
        %v267 = vld [vmem:[#allocation6 + $0x1b0] sm:$0xff]
        %v268 = vld [vmem:[#allocation6 + $0x1b8] sm:$0xff]
        %v269 = vld [vmem:[#allocation6 + $0x1c0] sm:$0xff]
        %v270 = vld [vmem:[#allocation6 + $0x1c8] sm:$0xff]
        %v271 = vld [vmem:[#allocation6 + $0x1d0] sm:$0xff]
        %v272 = vld [vmem:[#allocation6 + $0x1d8] sm:$0xff]
        %v273 = vld [vmem:[#allocation6 + $0x1e0] sm:$0xff]
        %v274 = vld [vmem:[#allocation6 + $0x1e8] sm:$0xff]
        %v275 = vld [vmem:[#allocation6 + $0x1f0] sm:$0xff]
        %v276 = vld [vmem:[#allocation6 + $0x1f8] sm:$0xff]
        %v277 = vld [vmem:[#allocation6 + $0x200] sm:$0xff]
        %v278 = vld [vmem:[#allocation6 + $0x208] sm:$0xff]
        %v279 = vld [vmem:[#allocation6 + $0x210] sm:$0xff]
        %v280 = vld [vmem:[#allocation6 + $0x218] sm:$0xff]
        %v281 = vld [vmem:[#allocation6 + $0x220] sm:$0xff]
        %v282 = vld [vmem:[#allocation6 + $0x228] sm:$0xff]
        %v283 = vld [vmem:[#allocation6 + $0x230] sm:$0xff]
        %v284 = vld [vmem:[#allocation6 + $0x238] sm:$0xff]
        %v285 = vld [vmem:[#allocation6 + $0x240] sm:$0xff]
        %v286 = vld [vmem:[#allocation6 + $0x248] sm:$0xff]
        %v287 = vld [vmem:[#allocation6 + $0x250] sm:$0xff]
        %v288 = vld [vmem:[#allocation6 + $0x258] sm:$0xff]
        %v289 = vld [vmem:[#allocation6 + $0x260] sm:$0xff]
        %v290 = vld [vmem:[#allocation6 + $0x268] sm:$0xff]
        %v291 = vld [vmem:[#allocation6 + $0x270] sm:$0xff]
        %v292 = vld [vmem:[#allocation6 + $0x278] sm:$0xff]
        %v293 = vld [vmem:[#allocation6 + $0x280] sm:$0xff]
        %v294 = vld [vmem:[#allocation6 + $0x288] sm:$0xff]
        %v295 = vld [vmem:[#allocation6 + $0x290] sm:$0xff]
        %v296 = vld [vmem:[#allocation6 + $0x298] sm:$0xff]
        %v297 = vld [vmem:[#allocation6 + $0x2a0] sm:$0xff]
        %v298 = vld [vmem:[#allocation6 + $0x2a8] sm:$0xff]
        %v299 = vld [vmem:[#allocation6 + $0x2b0] sm:$0xff]
        %v300 = vld [vmem:[#allocation6 + $0x2b8] sm:$0xff]
        %v301 = vld [vmem:[#allocation6 + $0x2c0] sm:$0xff]
        %v302 = vld [vmem:[#allocation6 + $0x2c8] sm:$0xff]
        %v303 = vld [vmem:[#allocation6 + $0x2d0] sm:$0xff]
        %v304 = vld [vmem:[#allocation6 + $0x2d8] sm:$0xff]
        %v305 = vld [vmem:[#allocation6 + $0x2e0] sm:$0xff]
        %v306 = vld [vmem:[#allocation6 + $0x2e8] sm:$0xff]
        %v307 = vld [vmem:[#allocation6 + $0x2f0] sm:$0xff]
        %v308 = vld [vmem:[#allocation6 + $0x2f8] sm:$0xff]
        %v309 = vld [vmem:[#allocation6 + $0x300] sm:$0xff]
        %v310 = vld [vmem:[#allocation6 + $0x308] sm:$0xff]
        %v311 = vld [vmem:[#allocation6 + $0x310] sm:$0xff]
        %v312 = vld [vmem:[#allocation6 + $0x318] sm:$0xff]
        %v313 = vld [vmem:[#allocation6 + $0x320] sm:$0xff]
        %v314 = vld [vmem:[#allocation6 + $0x328] sm:$0xff]
        %v315 = vld [vmem:[#allocation6 + $0x330] sm:$0xff]
        %v316 = vld [vmem:[#allocation6 + $0x338] sm:$0xff]
        %v317 = vld [vmem:[#allocation6 + $0x340] sm:$0xff]
        %v318 = vld [vmem:[#allocation6 + $0x348] sm:$0xff]
        %v319 = vld [vmem:[#allocation6 + $0x350] sm:$0xff]
        %v320 = vld [vmem:[#allocation6 + $0x358] sm:$0xff]
        %v321 = vld [vmem:[#allocation6 + $0x360] sm:$0xff]
        %v322 = vld [vmem:[#allocation6 + $0x368] sm:$0xff]
        %v323 = vld [vmem:[#allocation6 + $0x370] sm:$0xff]
        %v324 = vld [vmem:[#allocation6 + $0x378] sm:$0xff]
        %v325 = vld [vmem:[#allocation6 + $0x380] sm:$0xff]
        %v326 = vld [vmem:[#allocation6 + $0x388] sm:$0xff]
        %v327 = vld [vmem:[#allocation6 + $0x390] sm:$0xff]
        %v328 = vld [vmem:[#allocation6 + $0x398] sm:$0xff]
        %v329 = vld [vmem:[#allocation6 + $0x3a0] sm:$0xff]
        %v330 = vld [vmem:[#allocation6 + $0x3a8] sm:$0xff]
        %v331 = vld [vmem:[#allocation6 + $0x3b0] sm:$0xff]
        %v332 = vld [vmem:[#allocation6 + $0x3b8] sm:$0xff]
        %v333 = vld [vmem:[#allocation6 + $0x3c0] sm:$0xff]
        %v334 = vld [vmem:[#allocation6 + $0x3c8] sm:$0xff]
        %v335 = vld [vmem:[#allocation6 + $0x3d0] sm:$0xff]
        %v336 = vld [vmem:[#allocation6 + $0x3d8] sm:$0xff]
        %v337 = vld [vmem:[#allocation6 + $0x3e0] sm:$0xff]
        %v338 = vld [vmem:[#allocation6 + $0x3e8] sm:$0xff]
        %v339 = vld [vmem:[#allocation6 + $0x3f0] sm:$0xff]
        %v340 = vld [vmem:[#allocation6 + $0x3f8] sm:$0xff]
        %v341 = vld [vmem:[#allocation6 + $0x400] sm:$0xff]
        %v342 = vld [vmem:[#allocation6 + $0x408] sm:$0xff]
        %v343 = vld [vmem:[#allocation6 + $0x410] sm:$0xff]
        %v344 = vld [vmem:[#allocation6 + $0x418] sm:$0xff]
        %v345 = vld [vmem:[#allocation6 + $0x420] sm:$0xff]
        %v346 = vld [vmem:[#allocation6 + $0x428] sm:$0xff]
        %v347 = vld [vmem:[#allocation6 + $0x430] sm:$0xff]
        %v348 = vld [vmem:[#allocation6 + $0x438] sm:$0xff]
        %v349 = vld [vmem:[#allocation6 + $0x440] sm:$0xff]
        %v350 = vld [vmem:[#allocation6 + $0x448] sm:$0xff]
        %v351 = vld [vmem:[#allocation6 + $0x450] sm:$0xff]
        %v352 = vld [vmem:[#allocation6 + $0x458] sm:$0xff]
        %v353 = vld [vmem:[#allocation6 + $0x460] sm:$0xff]
        %v354 = vld [vmem:[#allocation6 + $0x468] sm:$0xff]
        %v355 = vld [vmem:[#allocation6 + $0x470] sm:$0xff]
        %v356 = vld [vmem:[#allocation6 + $0x478] sm:$0xff]
        %v357 = vld [vmem:[#allocation6 + $0x480] sm:$0xff]
        %v358 = vld [vmem:[#allocation6 + $0x488] sm:$0xff]
        %v359 = vld [vmem:[#allocation6 + $0x490] sm:$0xff]
        %v360 = vld [vmem:[#allocation6 + $0x498] sm:$0xff]
        %v361 = vld [vmem:[#allocation6 + $0x4a0] sm:$0xff]
        %v362 = vld [vmem:[#allocation6 + $0x4a8] sm:$0xff]
        %v363 = vld [vmem:[#allocation6 + $0x4b0] sm:$0xff]
        %v364 = vld [vmem:[#allocation6 + $0x4b8] sm:$0xff]
        %v365 = vld [vmem:[#allocation6 + $0x4c0] sm:$0xff]
        %v366 = vld [vmem:[#allocation6 + $0x4c8] sm:$0xff]
        %v367 = vld [vmem:[#allocation6 + $0x4d0] sm:$0xff]
        %v368 = vld [vmem:[#allocation6 + $0x4d8] sm:$0xff]
        %v369 = vld [vmem:[#allocation6 + $0x4e0] sm:$0xff]
        %v370 = vld [vmem:[#allocation6 + $0x4e8] sm:$0xff]
        %v371 = vld [vmem:[#allocation6 + $0x4f0] sm:$0xff]
        %v372 = vld [vmem:[#allocation6 + $0x4f8] sm:$0xff]
        %s373 = sld [smem:[#allocation2]]
        %v374 = vstv %s373
        %375 = vmatprep.subr.mxu0 0.0
        %376 = vmatpush1.msra.mxu0 %v213
        %377 = vmatprep.subr.mxu0 0.0
        %378 = vmatpush1.msra.mxu0 %v214
        %379 = vmatprep.subr.mxu0 0.0
        %380 = vmatpush1.msra.mxu0 %v215
        %381 = vmatprep.subr.mxu0 0.0
        %382 = vmatpush1.msra.mxu0 %v216
        %383 = vmatprep.subr.mxu0 0.0
        %384 = vmatpush1.msra.mxu0 %v217
        %385 = vmatprep.subr.mxu0 0.0
        %386 = vmatpush1.msra.mxu0 %v218
        %387 = vmatprep.subr.mxu0 0.0
        %388 = vmatpush1.msra.mxu0 %v219
        %389 = vmatprep.subr.mxu0 0.0
        %390 = vmatpush1.msra.mxu0 %v220
        %391 = vmatprep.subr.mxu0 0.0
        %392 = vmatpush1.msra.mxu0 %v221
        %393 = vmatprep.subr.mxu0 0.0
        %394 = vmatpush1.msra.mxu0 %v222
        %395 = vmatprep.subr.mxu0 0.0
        %396 = vmatpush1.msra.mxu0 %v223
        %397 = vmatprep.subr.mxu0 0.0
        %398 = vmatpush1.msra.mxu0 %v224
        %399 = vmatprep.subr.mxu0 0.0
        %400 = vmatpush1.msra.mxu0 %v225
        %401 = vmatprep.subr.mxu0 0.0
        %402 = vmatpush1.msra.mxu0 %v226
        %403 = vmatprep.subr.mxu0 0.0
        %404 = vmatpush1.msra.mxu0 %v227
        %405 = vmatprep.subr.mxu0 0.0
        %406 = vmatpush1.msra.mxu0 %v228
        %407 = vmatprep.subr.mxu0 0.0
        %408 = vmatpush1.msra.mxu0 %v229
        %409 = vmatprep.subr.mxu0 0.0
        %410 = vmatpush1.msra.mxu0 %v230
        %411 = vmatprep.subr.mxu0 0.0
        %412 = vmatpush1.msra.mxu0 %v231
        %413 = vmatprep.subr.mxu0 0.0
        %414 = vmatpush1.msra.mxu0 %v232
        %415 = vmatprep.subr.mxu0 0.0
        %416 = vmatpush1.msra.mxu0 %v233
        %417 = vmatprep.subr.mxu0 0.0
        %418 = vmatpush1.msra.mxu0 %v234
        %419 = vmatprep.subr.mxu0 0.0
        %420 = vmatpush1.msra.mxu0 %v235
        %421 = vmatprep.subr.mxu0 0.0
        %422 = vmatpush1.msra.mxu0 %v236
        %423 = vmatprep.subr.mxu0 0.0
        %424 = vmatpush1.msra.mxu0 %v237
        %425 = vmatprep.subr.mxu0 0.0
        %426 = vmatpush1.msra.mxu0 %v238
        %427 = vmatprep.subr.mxu0 0.0
        %428 = vmatpush1.msra.mxu0 %v239
        %429 = vmatprep.subr.mxu0 0.0
        %430 = vmatpush1.msra.mxu0 %v240
        %431 = vmatprep.subr.mxu0 0.0
        %432 = vmatpush1.msra.mxu0 %v241
        %433 = vmatprep.subr.mxu0 0.0
        %434 = vmatpush1.msra.mxu0 %v242
        %435 = vmatprep.subr.mxu0 0.0
        %436 = vmatpush1.msra.mxu0 %v243
        %437 = vmatprep.subr.mxu0 0.0
        %438 = vmatpush1.msra.mxu0 %v244
        %439 = vmatprep.mubr.f32.mxu0 %v204
        %440 = vmatmul.mubr.f32.gmra.mrb[0].mxu0 %v203
        %v441 = vpop.f32.mrb[0].mxu0
        %v442 = vadd.f32 %v374, %v441
        %v443 = vpop.f32.mrb[0].mxu0
        %444 = vdwg.mxu0
        %445 = vmatprep.subr.mxu0 0.0
        %446 = vmatpush1.msra.mxu0 %v245
        %447 = vmatprep.subr.mxu0 0.0
        %448 = vmatpush1.msra.mxu0 %v246
        %449 = vmatprep.subr.mxu0 0.0
        %450 = vmatpush1.msra.mxu0 %v247
        %451 = vmatprep.subr.mxu0 0.0
        %452 = vmatpush1.msra.mxu0 %v248
        %453 = vmatprep.subr.mxu0 0.0
        %454 = vmatpush1.msra.mxu0 %v249
        %455 = vmatprep.subr.mxu0 0.0
        %456 = vmatpush1.msra.mxu0 %v250
        %457 = vmatprep.subr.mxu0 0.0
        %458 = vmatpush1.msra.mxu0 %v251
        %459 = vmatprep.subr.mxu0 0.0
        %460 = vmatpush1.msra.mxu0 %v252
        %461 = vmatprep.subr.mxu0 0.0
        %462 = vmatpush1.msra.mxu0 %v253
        %463 = vmatprep.subr.mxu0 0.0
        %464 = vmatpush1.msra.mxu0 %v254
        %465 = vmatprep.subr.mxu0 0.0
        %466 = vmatpush1.msra.mxu0 %v255
        %467 = vmatprep.subr.mxu0 0.0
        %468 = vmatpush1.msra.mxu0 %v256
        %469 = vmatprep.subr.mxu0 0.0
        %470 = vmatpush1.msra.mxu0 %v257
        %471 = vmatprep.subr.mxu0 0.0
        %472 = vmatpush1.msra.mxu0 %v258
        %473 = vmatprep.subr.mxu0 0.0
        %474 = vmatpush1.msra.mxu0 %v259
        %475 = vmatprep.subr.mxu0 0.0
        %476 = vmatpush1.msra.mxu0 %v260
        %477 = vmatprep.subr.mxu0 0.0
        %478 = vmatpush1.msra.mxu0 %v261
        %479 = vmatprep.subr.mxu0 0.0
        %480 = vmatpush1.msra.mxu0 %v262
        %481 = vmatprep.subr.mxu0 0.0
        %482 = vmatpush1.msra.mxu0 %v263
        %483 = vmatprep.subr.mxu0 0.0
        %484 = vmatpush1.msra.mxu0 %v264
        %485 = vmatprep.subr.mxu0 0.0
        %486 = vmatpush1.msra.mxu0 %v265
        %487 = vmatprep.subr.mxu0 0.0
        %488 = vmatpush1.msra.mxu0 %v266
        %489 = vmatprep.subr.mxu0 0.0
        %490 = vmatpush1.msra.mxu0 %v267
        %491 = vmatprep.subr.mxu0 0.0
        %492 = vmatpush1.msra.mxu0 %v268
        %493 = vmatprep.subr.mxu0 0.0
        %494 = vmatpush1.msra.mxu0 %v269
        %495 = vmatprep.subr.mxu0 0.0
        %496 = vmatpush1.msra.mxu0 %v270
        %497 = vmatprep.subr.mxu0 0.0
        %498 = vmatpush1.msra.mxu0 %v271
        %499 = vmatprep.subr.mxu0 0.0
        %500 = vmatpush1.msra.mxu0 %v272
        %501 = vmatprep.subr.mxu0 0.0
        %502 = vmatpush1.msra.mxu0 %v273
        %503 = vmatprep.subr.mxu0 0.0
        %504 = vmatpush1.msra.mxu0 %v274
        %505 = vmatprep.subr.mxu0 0.0
        %506 = vmatpush1.msra.mxu0 %v275
        %507 = vmatprep.subr.mxu0 0.0
        %508 = vmatpush1.msra.mxu0 %v276
        %509 = vmatprep.mubr.f32.mxu0 %v206
        %510 = vmatmul.mubr.f32.gmra.mrb[0].mxu0 %v205
        %v511 = vpop.f32.mrb[0].mxu0
        %v512 = vadd.f32 %v442, %v511
        %v513 = vpop.f32.mrb[0].mxu0
        %514 = vdwg.mxu0
        %515 = vmatprep.subr.mxu0 0.0
        %516 = vmatpush1.msra.mxu0 %v277
        %517 = vmatprep.subr.mxu0 0.0
        %518 = vmatpush1.msra.mxu0 %v278
        %519 = vmatprep.subr.mxu0 0.0
        %520 = vmatpush1.msra.mxu0 %v279
        %521 = vmatprep.subr.mxu0 0.0
        %522 = vmatpush1.msra.mxu0 %v280
        %523 = vmatprep.subr.mxu0 0.0
        %524 = vmatpush1.msra.mxu0 %v281
        %525 = vmatprep.subr.mxu0 0.0
        %526 = vmatpush1.msra.mxu0 %v282
        %527 = vmatprep.subr.mxu0 0.0
        %528 = vmatpush1.msra.mxu0 %v283
        %529 = vmatprep.subr.mxu0 0.0
        %530 = vmatpush1.msra.mxu0 %v284
        %531 = vmatprep.subr.mxu0 0.0
        %532 = vmatpush1.msra.mxu0 %v285
        %533 = vmatprep.subr.mxu0 0.0
        %534 = vmatpush1.msra.mxu0 %v286
        %535 = vmatprep.subr.mxu0 0.0
        %536 = vmatpush1.msra.mxu0 %v287
        %537 = vmatprep.subr.mxu0 0.0
        %538 = vmatpush1.msra.mxu0 %v288
        %539 = vmatprep.subr.mxu0 0.0
        %540 = vmatpush1.msra.mxu0 %v289
        %541 = vmatprep.subr.mxu0 0.0
        %542 = vmatpush1.msra.mxu0 %v290
        %543 = vmatprep.subr.mxu0 0.0
        %544 = vmatpush1.msra.mxu0 %v291
        %545 = vmatprep.subr.mxu0 0.0
        %546 = vmatpush1.msra.mxu0 %v292
        %547 = vmatprep.subr.mxu0 0.0
        %548 = vmatpush1.msra.mxu0 %v293
        %549 = vmatprep.subr.mxu0 0.0
        %550 = vmatpush1.msra.mxu0 %v294
        %551 = vmatprep.subr.mxu0 0.0
        %552 = vmatpush1.msra.mxu0 %v295
        %553 = vmatprep.subr.mxu0 0.0
        %554 = vmatpush1.msra.mxu0 %v296
        %555 = vmatprep.subr.mxu0 0.0
        %556 = vmatpush1.msra.mxu0 %v297
        %557 = vmatprep.subr.mxu0 0.0
        %558 = vmatpush1.msra.mxu0 %v298
        %559 = vmatprep.subr.mxu0 0.0
        %560 = vmatpush1.msra.mxu0 %v299
        %561 = vmatprep.subr.mxu0 0.0
        %562 = vmatpush1.msra.mxu0 %v300
        %563 = vmatprep.subr.mxu0 0.0
        %564 = vmatpush1.msra.mxu0 %v301
        %565 = vmatprep.subr.mxu0 0.0
        %566 = vmatpush1.msra.mxu0 %v302
        %567 = vmatprep.subr.mxu0 0.0
        %568 = vmatpush1.msra.mxu0 %v303
        %569 = vmatprep.subr.mxu0 0.0
        %570 = vmatpush1.msra.mxu0 %v304
        %571 = vmatprep.subr.mxu0 0.0
        %572 = vmatpush1.msra.mxu0 %v305
        %573 = vmatprep.subr.mxu0 0.0
        %574 = vmatpush1.msra.mxu0 %v306
        %575 = vmatprep.subr.mxu0 0.0
        %576 = vmatpush1.msra.mxu0 %v307
        %577 = vmatprep.subr.mxu0 0.0
        %578 = vmatpush1.msra.mxu0 %v308
        %579 = vmatprep.mubr.f32.mxu0 %v208
        %580 = vmatmul.mubr.f32.gmra.mrb[0].mxu0 %v207
        %v581 = vpop.f32.mrb[0].mxu0
        %v582 = vadd.f32 %v512, %v581
        %v583 = vpop.f32.mrb[0].mxu0
        %584 = vdwg.mxu0
        %585 = vmatprep.subr.mxu0 0.0
        %586 = vmatpush1.msra.mxu0 %v309
        %587 = vmatprep.subr.mxu0 0.0
        %588 = vmatpush1.msra.mxu0 %v310
        %589 = vmatprep.subr.mxu0 0.0
        %590 = vmatpush1.msra.mxu0 %v311
        %591 = vmatprep.subr.mxu0 0.0
        %592 = vmatpush1.msra.mxu0 %v312
        %593 = vmatprep.subr.mxu0 0.0
        %594 = vmatpush1.msra.mxu0 %v313
        %595 = vmatprep.subr.mxu0 0.0
        %596 = vmatpush1.msra.mxu0 %v314
        %597 = vmatprep.subr.mxu0 0.0
        %598 = vmatpush1.msra.mxu0 %v315
        %599 = vmatprep.subr.mxu0 0.0
        %600 = vmatpush1.msra.mxu0 %v316
        %601 = vmatprep.subr.mxu0 0.0
        %602 = vmatpush1.msra.mxu0 %v317
        %603 = vmatprep.subr.mxu0 0.0
        %604 = vmatpush1.msra.mxu0 %v318
        %605 = vmatprep.subr.mxu0 0.0
        %606 = vmatpush1.msra.mxu0 %v319
        %607 = vmatprep.subr.mxu0 0.0
        %608 = vmatpush1.msra.mxu0 %v320
        %609 = vmatprep.subr.mxu0 0.0
        %610 = vmatpush1.msra.mxu0 %v321
        %611 = vmatprep.subr.mxu0 0.0
        %612 = vmatpush1.msra.mxu0 %v322
        %613 = vmatprep.subr.mxu0 0.0
        %614 = vmatpush1.msra.mxu0 %v323
        %615 = vmatprep.subr.mxu0 0.0
        %616 = vmatpush1.msra.mxu0 %v324
        %617 = vmatprep.subr.mxu0 0.0
        %618 = vmatpush1.msra.mxu0 %v325
        %619 = vmatprep.subr.mxu0 0.0
        %620 = vmatpush1.msra.mxu0 %v326
        %621 = vmatprep.subr.mxu0 0.0
        %622 = vmatpush1.msra.mxu0 %v327
        %623 = vmatprep.subr.mxu0 0.0
        %624 = vmatpush1.msra.mxu0 %v328
        %625 = vmatprep.subr.mxu0 0.0
        %626 = vmatpush1.msra.mxu0 %v329
        %627 = vmatprep.subr.mxu0 0.0
        %628 = vmatpush1.msra.mxu0 %v330
        %629 = vmatprep.subr.mxu0 0.0
        %630 = vmatpush1.msra.mxu0 %v331
        %631 = vmatprep.subr.mxu0 0.0
        %632 = vmatpush1.msra.mxu0 %v332
        %633 = vmatprep.subr.mxu0 0.0
        %634 = vmatpush1.msra.mxu0 %v333
        %635 = vmatprep.subr.mxu0 0.0
        %636 = vmatpush1.msra.mxu0 %v334
        %637 = vmatprep.subr.mxu0 0.0
        %638 = vmatpush1.msra.mxu0 %v335
        %639 = vmatprep.subr.mxu0 0.0
        %640 = vmatpush1.msra.mxu0 %v336
        %641 = vmatprep.subr.mxu0 0.0
        %642 = vmatpush1.msra.mxu0 %v337
        %643 = vmatprep.subr.mxu0 0.0
        %644 = vmatpush1.msra.mxu0 %v338
        %645 = vmatprep.subr.mxu0 0.0
        %646 = vmatpush1.msra.mxu0 %v339
        %647 = vmatprep.subr.mxu0 0.0
        %648 = vmatpush1.msra.mxu0 %v340
        %649 = vmatprep.mubr.f32.mxu0 %v210
        %650 = vmatmul.mubr.f32.gmra.mrb[0].mxu0 %v209
        %v651 = vpop.f32.mrb[0].mxu0
        %v652 = vadd.f32 %v582, %v651
        %v653 = vpop.f32.mrb[0].mxu0
        %654 = vdwg.mxu0
        %655 = vmatprep.subr.mxu0 0.0
        %656 = vmatpush1.msra.mxu0 %v341
        %657 = vmatprep.subr.mxu0 0.0
        %658 = vmatpush1.msra.mxu0 %v342
        %659 = vmatprep.subr.mxu0 0.0
        %660 = vmatpush1.msra.mxu0 %v343
        %661 = vmatprep.subr.mxu0 0.0
        %662 = vmatpush1.msra.mxu0 %v344
        %663 = vmatprep.subr.mxu0 0.0
        %664 = vmatpush1.msra.mxu0 %v345
        %665 = vmatprep.subr.mxu0 0.0
        %666 = vmatpush1.msra.mxu0 %v346
        %667 = vmatprep.subr.mxu0 0.0
        %668 = vmatpush1.msra.mxu0 %v347
        %669 = vmatprep.subr.mxu0 0.0
        %670 = vmatpush1.msra.mxu0 %v348
        %671 = vmatprep.subr.mxu0 0.0
        %672 = vmatpush1.msra.mxu0 %v349
        %673 = vmatprep.subr.mxu0 0.0
        %674 = vmatpush1.msra.mxu0 %v350
        %675 = vmatprep.subr.mxu0 0.0
        %676 = vmatpush1.msra.mxu0 %v351
        %677 = vmatprep.subr.mxu0 0.0
        %678 = vmatpush1.msra.mxu0 %v352
        %679 = vmatprep.subr.mxu0 0.0
        %680 = vmatpush1.msra.mxu0 %v353
        %681 = vmatprep.subr.mxu0 0.0
        %682 = vmatpush1.msra.mxu0 %v354
        %683 = vmatprep.subr.mxu0 0.0
        %684 = vmatpush1.msra.mxu0 %v355
        %685 = vmatprep.subr.mxu0 0.0
        %686 = vmatpush1.msra.mxu0 %v356
        %687 = vmatprep.subr.mxu0 0.0
        %688 = vmatpush1.msra.mxu0 %v357
        %689 = vmatprep.subr.mxu0 0.0
        %690 = vmatpush1.msra.mxu0 %v358
        %691 = vmatprep.subr.mxu0 0.0
        %692 = vmatpush1.msra.mxu0 %v359
        %693 = vmatprep.subr.mxu0 0.0
        %694 = vmatpush1.msra.mxu0 %v360
        %695 = vmatprep.subr.mxu0 0.0
        %696 = vmatpush1.msra.mxu0 %v361
        %697 = vmatprep.subr.mxu0 0.0
        %698 = vmatpush1.msra.mxu0 %v362
        %699 = vmatprep.subr.mxu0 0.0
        %700 = vmatpush1.msra.mxu0 %v363
        %701 = vmatprep.subr.mxu0 0.0
        %702 = vmatpush1.msra.mxu0 %v364
        %703 = vmatprep.subr.mxu0 0.0
        %704 = vmatpush1.msra.mxu0 %v365
        %705 = vmatprep.subr.mxu0 0.0
        %706 = vmatpush1.msra.mxu0 %v366
        %707 = vmatprep.subr.mxu0 0.0
        %708 = vmatpush1.msra.mxu0 %v367
        %709 = vmatprep.subr.mxu0 0.0
        %710 = vmatpush1.msra.mxu0 %v368
        %711 = vmatprep.subr.mxu0 0.0
        %712 = vmatpush1.msra.mxu0 %v369
        %713 = vmatprep.subr.mxu0 0.0
        %714 = vmatpush1.msra.mxu0 %v370
        %715 = vmatprep.subr.mxu0 0.0
        %716 = vmatpush1.msra.mxu0 %v371
        %717 = vmatprep.subr.mxu0 0.0
        %718 = vmatpush1.msra.mxu0 %v372
        %719 = vmatprep.mubr.f32.mxu0 %v212
        %720 = vmatmul.mubr.f32.gmra.mrb[0].mxu0 %v211
        %v721 = vpop.f32.mrb[0].mxu0
        %v722 = vadd.f32 %v652, %v721
        %v723 = vpop.f32.mrb[0].mxu0
        %724 = vdwg.mxu0
        %725 = vst [vmem:[%s202] sm:$0xff] %v722
        %s726 = sand.u32 %s98, 1
        %s727 = scalar_lea.sflag [#allocation5], %s726
        %s728 = sand.u32 %s98, 1
        %s729 = smul.addr %s728, 8
        %s730 = scalar_lea.vmem [#allocation8], %s729
        // Predicated region
        $region41: #{tpu_custom_call.1} parent=31 // pred_check
          %p731 = pneg %p108
        $region42: #{tpu_custom_call.1} parent=31 // pred_check_branch
          %733 = sbr.rel (%p731) target = $region44
        $region43: #{tpu_custom_call.1} parent=31 // pred_region
          %s735 = ssub.s32 128, 128
          %736 = vsyncadd %s727, %s735
          %s737 = smul.addr %s22, 128
          %s738 = scalar_lea.hbm %s3, %s737
          %s740 = sshll.u32 %s730, 4
          %s741 = int_to_ptr.vmem [resolvable:$true] %s740
          %743 = dma.vmem_to_hbm [thread:$0]  %s741, 128, %s738, %s727
        $region44: #{tpu_custom_call.1} parent=31 // pred_fallthru
          _
      $region32: #{tpu_custom_call.1} parent=5 // pred_fallthru
        _
      %p744 = scmp.le.s32.totalorder 2, %s17
      // Predicated region
      $region45: #{tpu_custom_call.1} parent=5 // pred_check
        %p745 = pneg %p744
      $region46: #{tpu_custom_call.1} parent=5 // pred_check_branch
        %747 = sbr.rel (%p745) target = $region48
      $region47: #{tpu_custom_call.1} parent=5 // pred_region
        %s748 = ssub.s32 %s17, 2
        // Predicated region
        $region49: #{tpu_custom_call.1} parent=47 // pred_check
          %p749 = pneg %p114
        $region50: #{tpu_custom_call.1} parent=47 // pred_check_branch
          %751 = sbr.rel (%p749) target = $region52
        $region51: #{tpu_custom_call.1} parent=47 // pred_region
          %s752 = sand.u32 %s99, 1
          %s753 = scalar_lea.sflag [#allocation5], %s752
          %s754 = sand.u32 %s99, 1
          %s755 = smul.addr %s754, 8
          %s756 = scalar_lea.vmem [#allocation8], %s755
          %757 = dma.done %s753, 128
        $region52: #{tpu_custom_call.1} parent=47 // pred_fallthru
          _
      $region48: #{tpu_custom_call.1} parent=5 // pred_fallthru
        _
    $region6: #{tpu_custom_call.1} parent=1 // loop_footer
      %s21 = sadd.s32 1, %s17
    $region7: #{tpu_custom_call.1} parent=1 // loop_footer_branch
      %16 = sbr.rel target = $region3
    $region8: #{tpu_custom_call.1} parent=1 // loop_exit
      _
    %758 = vsyncpa [#allocation4], 1
    %s759 = scalar_lea.sflag [#allocation4], 1
    %760 = vsyncpa %s759, 1
    %761 = vsyncpa [#allocation7], 1
    %762 = vsyncpa [#allocation5], 1
    %s763 = scalar_lea.sflag [#allocation5], 1
    %764 = vsyncpa %s763, 1

</llo_original>
